<compile_context>
chip_gen: v5e
topology: v5e:2x2
jax: 0.10.0
libtpu: 0.0.40
codegen_flags: <defaults>
</compile_context>

<pallas_src>
import functools

import jax
import jax.numpy as jnp
from jax import lax
from jax.experimental import pallas as pl
from jax.experimental.pallas import tpu as pltpu


_INV_SQRT2 = 0.7071067811865476
_SQRT_2_OVER_PI = 0.7978845608028654
_VMEM_BUDGET = 44 * 1024 * 1024          # conservative wrt v7x's 64 MiB / TC
_VMEM_LIMIT = 48 * 1024 * 1024


def _gelu_f32(h, approximate):
    if approximate:
        # tanh form rides the EUP (own VLIW slot) instead of the erf
        # polynomial on the VALU.
        inner = _SQRT_2_OVER_PI * (h + 0.044715 * h * h * h)
        return 0.5 * h * (1.0 + jnp.tanh(inner))
    # Exact (erf) GELU -- matches nn.GELU() default.
    return 0.5 * h * (1.0 + lax.erf(h * jnp.float32(_INV_SQRT2)))


def _mlp_kernel_resident(x_ref, w1_ref, b1_ref, w2_ref, b2_ref, o_ref, *,
                         approximate):
    # x_ref:  (TM, E)   current tile of tokens
    # w1_ref: (E, H)    full fc1 weight (VMEM-resident, fetched once)
    # b1_ref: (1, H)    fc1 bias
    # w2_ref: (H, E)    full fc2 weight (VMEM-resident, fetched once)
    # b2_ref: (1, E)    fc2 bias
    # o_ref:  (TM, E)   output tile
    h = jnp.dot(x_ref[...], w1_ref[...], preferred_element_type=jnp.float32)
    h = h + b1_ref[...].astype(jnp.float32)
    h = _gelu_f32(h, approximate)
    out = jnp.dot(h.astype(w2_ref.dtype), w2_ref[...],
                  preferred_element_type=jnp.float32)
    o_ref[...] = (out + b2_ref[...].astype(jnp.float32)).astype(o_ref.dtype)


def _mlp_kernel_htiled(x_ref, w1_ref, b1_ref, w2_ref, b2_ref, o_ref, acc_ref,
                       *, approximate):
    # Fallback for weights too large to keep fully VMEM-resident.
    # x_ref:  (TM, E); w1_ref: (E, TH); b1_ref: (1, TH); w2_ref: (TH, E);
    # b2_ref: (1, E);  o_ref: (TM, E);  acc_ref: (TM, E) f32 accumulator.
    h_idx = pl.program_id(1)

    @pl.when(h_idx == 0)
    def _():
        acc_ref[...] = jnp.zeros_like(acc_ref)

    h = jnp.dot(x_ref[...], w1_ref[...], preferred_element_type=jnp.float32)
    h = h + b1_ref[...].astype(jnp.float32)
    h = _gelu_f32(h, approximate)
    partial = jnp.dot(h.astype(w2_ref.dtype), w2_ref[...],
                      preferred_element_type=jnp.float32)

    is_last = h_idx == pl.num_programs(1) - 1

    @pl.when(jnp.logical_not(is_last))
    def _():
        acc_ref[...] = acc_ref[...] + partial

    @pl.when(is_last)
    def _():
        # Write the output directly from (acc + last partial + b2) -- avoids
        # one extra (TM, E) f32 store + reload on the final reduction step.
        o_ref[...] = (acc_ref[...] + partial
                      + b2_ref[...].astype(jnp.float32)).astype(o_ref.dtype)


def _round_up(x, m):
    return ((x + m - 1) // m) * m


@functools.partial(
    jax.jit,
    static_argnames=("tile_m", "tile_h", "gelu_approximate",
                     "force_hidden_tiling"))
def mlp_pallas(x, w1, b1, w2, b2, *, tile_m=1024, tile_h=1536,
               gelu_approximate=False, force_hidden_tiling=False):
    """x: (B, S, E); w1: (E, H); b1: (H,); w2: (H, E); b2: (E,)."""
    B, S, E = x.shape
    H = w1.shape[1]
    M = B * S

    x_bytes = jnp.dtype(x.dtype).itemsize
    w_bytes = jnp.dtype(w1.dtype).itemsize
    o_bytes = x_bytes

    # ---- token-axis tile ---------------------------------------------------
    tile_m = max(8, _round_up(tile_m, 8))
    tm = min(tile_m, _round_up(M, 8))
    m_pad = _round_up(M, tm)
    if m_pad // tm < 2 and M >= 512:
        # Keep >= 2 token tiles so the "parallel" axis can split across
        # v7x's two TensorCores when there is enough work.
        tm = _round_up((M + 1) // 2, 8)
        m_pad = _round_up(M, tm)

    # ---- choose path: resident weights vs hidden-axis tiling ---------------
    def _resident_vmem(tm_):
        return (2 * 2 * E * H * w_bytes                 # w1 + w2, double-buffered
                + 2 * tm_ * E * (x_bytes + o_bytes)     # x / out tiles
                + 2 * (H + E) * w_bytes)                # biases

    use_resident = (not force_hidden_tiling) and _resident_vmem(tm) <= _VMEM_BUDGET

    x2d = x.reshape(M, E)
    if m_pad != M:
        x2d = jnp.pad(x2d, ((0, m_pad - M), (0, 0)))

    b2_2d = b2.reshape(1, E)
    n_m = m_pad // tm

    if use_resident:
        b1_2d = b1.reshape(1, H)
        cost = pl.CostEstimate(
            flops=4 * M * E * H,                         # fc1 + fc2
            transcendentals=M * H,
            bytes_accessed=(2 * M * E * x_bytes          # x in + out
                            + (2 * E * H + H + E) * w_bytes),
        )
        out2d = pl.pallas_call(
            functools.partial(_mlp_kernel_resident, approximate=gelu_approximate),
            out_shape=jax.ShapeDtypeStruct((m_pad, E), x.dtype),
            grid_spec=pltpu.PrefetchScalarGridSpec(
                num_scalar_prefetch=0,
                grid=(n_m,),
                in_specs=[
                    pl.BlockSpec((tm, E), lambda i: (i, 0)),   # x tile
                    pl.BlockSpec((E, H), lambda i: (0, 0)),    # w1 (resident)
                    pl.BlockSpec((1, H), lambda i: (0, 0)),    # b1
                    pl.BlockSpec((H, E), lambda i: (0, 0)),    # w2 (resident)
                    pl.BlockSpec((1, E), lambda i: (0, 0)),    # b2
                ],
                out_specs=pl.BlockSpec((tm, E), lambda i: (i, 0)),
            ),
            compiler_params=pltpu.CompilerParams(
                dimension_semantics=("parallel",),
                vmem_limit_bytes=_VMEM_LIMIT,
            ),
            cost_estimate=cost,
        )(x2d, w1, b1_2d, w2, b2_2d)
    else:
        # ---- hidden-axis tile (fallback for very large weights) ------------
        th = min(_round_up(tile_h, 128), _round_up(H, 128))

        def _tiled_vmem(tm_, th_):
            return (2 * tm_ * E * (x_bytes + o_bytes)    # x / out tiles
                    + 2 * 2 * E * th_ * w_bytes          # w1 / w2 blocks
                    + 2 * (th_ + E) * w_bytes            # biases
                    + tm_ * E * 4)                       # f32 accumulator

        while _tiled_vmem(tm, th) > _VMEM_BUDGET and th > 256:
            th = max(256, _round_up(th // 2, 128))
        while _tiled_vmem(tm, th) > _VMEM_BUDGET and tm > 256:
            tm = max(256, _round_up(tm // 2, 8))
            m_pad = _round_up(M, tm)
            n_m = m_pad // tm
            x2d = x.reshape(M, E)
            if m_pad != M:
                x2d = jnp.pad(x2d, ((0, m_pad - M), (0, 0)))

        h_pad = _round_up(H, th)
        if h_pad != H:
            # Zero-padded hidden units contribute exactly 0
            # (gelu(0) == 0, padded w2 rows == 0).
            w1 = jnp.pad(w1, ((0, 0), (0, h_pad - H)))
            b1 = jnp.pad(b1, ((0, h_pad - H),))
            w2 = jnp.pad(w2, ((0, h_pad - H), (0, 0)))
        b1_2d = b1.reshape(1, h_pad)

        n_h = h_pad // th
        cost = pl.CostEstimate(
            flops=4 * M * E * H,
            transcendentals=M * H,
            bytes_accessed=(2 * M * E * x_bytes
                            # weights/b1 are re-streamed once per token tile:
                            + n_m * (2 * E * h_pad + h_pad) * w_bytes
                            + E * w_bytes),
        )
        out2d = pl.pallas_call(
            functools.partial(_mlp_kernel_htiled, approximate=gelu_approximate),
            out_shape=jax.ShapeDtypeStruct((m_pad, E), x.dtype),
            grid_spec=pltpu.PrefetchScalarGridSpec(
                num_scalar_prefetch=0,
                grid=(n_m, n_h),                          # hidden (reduction) last
                in_specs=[
                    pl.BlockSpec((tm, E), lambda i, h: (i, 0)),   # x tile
                    pl.BlockSpec((E, th), lambda i, h: (0, h)),   # w1 block
                    pl.BlockSpec((1, th), lambda i, h: (0, h)),   # b1 block
                    pl.BlockSpec((th, E), lambda i, h: (h, 0)),   # w2 block
                    pl.BlockSpec((1, E), lambda i, h: (0, 0)),    # b2
                ],
                out_specs=pl.BlockSpec((tm, E), lambda i, h: (i, 0)),
                scratch_shapes=[pltpu.VMEM((tm, E), jnp.float32)],
            ),
            compiler_params=pltpu.CompilerParams(
                dimension_semantics=("parallel", "arbitrary"),
                vmem_limit_bytes=_VMEM_LIMIT,
            ),
            cost_estimate=cost,
        )(x2d, w1, b1_2d, w2, b2_2d)

    if m_pad != M:
        out2d = out2d[:M]
    return out2d.reshape(B, S, E)


def mlp_reference(x, w1, b1, w2, b2):
    h = jnp.dot(x, w1) + b1
    h = jax.nn.gelu(h, approximate=False)
    return jnp.dot(h, w2) + b2


if __name__ == "__main__":
    # Small ViT-style shapes: batch=2, seq=8, embed_dim=32, mlp_ratio=4 -> hidden=128
    B, S, E = 2, 8, 32
    H = E * 4

    key = jax.random.PRNGKey(0)
    k_x, k_w1, k_b1, k_w2, k_b2 = jax.random.split(key, 5)

    x = jax.random.normal(k_x, (B, S, E), dtype=jnp.float32)
    w1 = jax.random.normal(k_w1, (E, H), dtype=jnp.float32) * 0.02
    b1 = jax.random.normal(k_b1, (H,), dtype=jnp.float32) * 0.02
    w2 = jax.random.normal(k_w2, (H, E), dtype=jnp.float32) * 0.02
    b2 = jax.random.normal(k_b2, (E,), dtype=jnp.float32) * 0.02

    ref = mlp_reference(x, w1, b1, w2, b2)

    # 1) Default resident-weight path, f32, exact GELU: tight tolerance.
    out = jax.block_until_ready(mlp_pallas(x, w1, b1, w2, b2))
    assert out.shape == (B, S, E)
    assert jnp.allclose(out, ref, atol=1e-5, rtol=1e-5), "resident f32 mismatch"

    # 2) Hidden-tiled fallback path (forced, for coverage), f32.
    out_t = jax.block_until_ready(
        mlp_pallas(x, w1, b1, w2, b2, force_hidden_tiling=True))
    assert jnp.allclose(out_t, ref, atol=1e-5, rtol=1e-5), "tiled f32 mismatch"

    # 3) bf16 operands (preferred production dtype: native MXU feed, f32 accum).
    xb, w1b, b1b, w2b, b2b = (a.astype(jnp.bfloat16) for a in (x, w1, b1, w2, b2))
    out_bf16 = jax.block_until_ready(mlp_pallas(xb, w1b, b1b, w2b, b2b))
    ref_bf16 = mlp_reference(*(a.astype(jnp.float32) for a in (xb, w1b, b1b, w2b, b2b)))
    assert out_bf16.shape == (B, S, E)
    assert jnp.allclose(out_bf16.astype(jnp.float32), ref_bf16,
                        atol=2e-2, rtol=2e-2), "bf16 mismatch vs reference"

    print("KERNEL_OK")
</pallas_src>

<mosaic_0001>
module attributes {stable_mosaic.version = 11 : i64} {
  func.func @_mlp_kernel_resident(%arg0: i32, %arg1: memref<16x32xf32, #tpu.memory_space<vmem>>, %arg2: memref<32x128xf32, #tpu.memory_space<vmem>>, %arg3: memref<1x128xf32, #tpu.memory_space<vmem>>, %arg4: memref<128x32xf32, #tpu.memory_space<vmem>>, %arg5: memref<1x32xf32, #tpu.memory_space<vmem>>, %arg6: memref<16x32xf32, #tpu.memory_space<vmem>>) attributes {dimension_semantics = [#tpu.dimension_semantics<parallel>], iteration_bounds = array<i64: 1>, scalar_prefetch = 0 : i64, scratch_operands = 0 : i64, tpu.core_type = #tpu.core_type<tc>, window_params = [{transform_indices = @transform_0, window_bounds = array<i64: 16, 32>}, {pipeline_mode = #tpu.pipeline_mode<synchronous>, transform_indices = @transform_1, window_bounds = array<i64: 32, 128>}, {pipeline_mode = #tpu.pipeline_mode<synchronous>, transform_indices = @transform_2, window_bounds = array<i64: 1, 128>}, {pipeline_mode = #tpu.pipeline_mode<synchronous>, transform_indices = @transform_3, window_bounds = array<i64: 128, 32>}, {pipeline_mode = #tpu.pipeline_mode<synchronous>, transform_indices = @transform_4, window_bounds = array<i64: 1, 32>}, {transform_indices = @transform_5, window_bounds = array<i64: 16, 32>}]} {
    %c0 = arith.constant 0 : index
    %c0_0 = arith.constant 0 : index
    %0 = vector.load %arg1[%c0, %c0_0] : memref<16x32xf32, #tpu.memory_space<vmem>>, vector<16x32xf32>
    %c0_1 = arith.constant 0 : index
    %c0_2 = arith.constant 0 : index
    %1 = vector.load %arg2[%c0_1, %c0_2] : memref<32x128xf32, #tpu.memory_space<vmem>>, vector<32x128xf32>
    %cst = arith.constant dense<0.000000e+00> : vector<16x128xf32>
    %2 = tpu.matmul %0, %1, %cst {dimension_numbers = #tpu.dot_dimension_numbers<[1], [0], [0], [1], [0, 0, 1, 1], [], []>} : vector<16x32xf32>, vector<32x128xf32>, vector<16x128xf32> -> vector<16x128xf32>
    %c0_3 = arith.constant 0 : index
    %c0_4 = arith.constant 0 : index
    %3 = vector.load %arg3[%c0_3, %c0_4] : memref<1x128xf32, #tpu.memory_space<vmem>>, vector<1x128xf32>
    %4 = vector.broadcast %3 : vector<1x128xf32> to vector<16x128xf32>
    %5 = arith.addf %2, %4 : vector<16x128xf32>
    %cst_5 = arith.constant 5.000000e-01 : f32
    %6 = vector.broadcast %cst_5 : f32 to vector<16x128xf32>
    %7 = arith.mulf %6, %5 : vector<16x128xf32>
    %cst_6 = arith.constant 0.707106769 : f32
    %8 = vector.broadcast %cst_6 : f32 to vector<16x128xf32>
    %9 = arith.mulf %5, %8 : vector<16x128xf32>
    %10 = math.erf %9 : vector<16x128xf32>
    %cst_7 = arith.constant 1.000000e+00 : f32
    %11 = vector.broadcast %cst_7 : f32 to vector<16x128xf32>
    %12 = arith.addf %11, %10 : vector<16x128xf32>
    %13 = arith.mulf %7, %12 : vector<16x128xf32>
    %c0_8 = arith.constant 0 : index
    %c0_9 = arith.constant 0 : index
    %14 = vector.load %arg4[%c0_8, %c0_9] : memref<128x32xf32, #tpu.memory_space<vmem>>, vector<128x32xf32>
    %cst_10 = arith.constant dense<0.000000e+00> : vector<16x32xf32>
    %15 = tpu.matmul %13, %14, %cst_10 {dimension_numbers = #tpu.dot_dimension_numbers<[1], [0], [0], [1], [0, 0, 1, 1], [], []>} : vector<16x128xf32>, vector<128x32xf32>, vector<16x32xf32> -> vector<16x32xf32>
    %c0_11 = arith.constant 0 : index
    %c0_12 = arith.constant 0 : index
    %16 = vector.load %arg5[%c0_11, %c0_12] : memref<1x32xf32, #tpu.memory_space<vmem>>, vector<1x32xf32>
    %17 = vector.broadcast %16 : vector<1x32xf32> to vector<16x32xf32>
    %18 = arith.addf %15, %17 : vector<16x32xf32>
    %c0_13 = arith.constant 0 : index
    %c0_14 = arith.constant 0 : index
    %19 = vector.load %arg6[%c0_13, %c0_14] : memref<16x32xf32, #tpu.memory_space<vmem>>, vector<16x32xf32>
    tpu.vector_store %arg6[%c0_13, %c0_14], %18 {strides = array<i32>} : memref<16x32xf32, #tpu.memory_space<vmem>>, vector<16x32xf32>,
    return
  }
  func.func @transform_0(%arg0: i32) -> (i32, i32) {
    %c0_i32 = arith.constant 0 : i32
    %c0_i32_0 = arith.constant 0 : i32
    return %arg0, %c0_i32 : i32, i32
  }
  func.func @transform_1(%arg0: i32) -> (i32, i32) {
    %c0_i32 = arith.constant 0 : i32
    %c0_i32_0 = arith.constant 0 : i32
    %c0_i32_1 = arith.constant 0 : i32
    return %c0_i32, %c0_i32_0 : i32, i32
  }
  func.func @transform_2(%arg0: i32) -> (i32, i32) {
    %c0_i32 = arith.constant 0 : i32
    %c0_i32_0 = arith.constant 0 : i32
    %c0_i32_1 = arith.constant 0 : i32
    return %c0_i32, %c0_i32_0 : i32, i32
  }
  func.func @transform_3(%arg0: i32) -> (i32, i32) {
    %c0_i32 = arith.constant 0 : i32
    %c0_i32_0 = arith.constant 0 : i32
    %c0_i32_1 = arith.constant 0 : i32
    return %c0_i32, %c0_i32_0 : i32, i32
  }
  func.func @transform_4(%arg0: i32) -> (i32, i32) {
    %c0_i32 = arith.constant 0 : i32
    %c0_i32_0 = arith.constant 0 : i32
    %c0_i32_1 = arith.constant 0 : i32
    return %c0_i32, %c0_i32_0 : i32, i32
  }
  func.func @transform_5(%arg0: i32) -> (i32, i32) {
    %c0_i32 = arith.constant 0 : i32
    %c0_i32_0 = arith.constant 0 : i32
    return %arg0, %c0_i32 : i32, i32
  }
}

</mosaic_0001>

<llo_original>
// kernel: mlp_pallas.1
$region0: #{mlp_pallas.1}
  #allocation0 [shape = 'u32[]', space=smem, size = 0x4, offset = 0x4, fixed_abs, tag = 'smem constant byte address 0x4 - core index']
  #allocation1 [shape = 'u32[72,128]{1,0:T(1,128)}', space=vmem, size = 0x9000, scoped, tag = 'internal scratch']
  %s0 = inlined_call_operand.vmem [shape: f32[16,32], index: 0, kind: input, shape index: {}]
  %s1 = inlined_call_operand.vmem [shape: f32[32,128], index: 1, kind: input, shape index: {}]
  %s2 = inlined_call_operand.vmem [shape: f32[1,128], index: 2, kind: input, shape index: {}]
  %s3 = inlined_call_operand.vmem [shape: f32[128,32], index: 3, kind: input, shape index: {}]
  %s4 = inlined_call_operand.vmem [shape: f32[1,32], index: 4, kind: input, shape index: {}]
  %s5 = inlined_call_operand.hbm [shape: f32[16,32], index: 5, kind: output, shape index: {}]
  %s6 = sld [smem:[#allocation0]]
  $region30: #{mlp_pallas.1} parent=0
    _
  %s8 = ssub.s32 1, %s6
  %s9 = scalar_select 0, %s8, %s6
  $region1: #{mlp_pallas.1} parent=0
    #allocation2 [shape = 'u8[8192]{0}', space=vmem, size = 0x2000, scoped, tag = 'output window, operand 0, single buffered']
    #allocation3 [shape = 's32[1]{0}', space=sflag, size = 0x4, scoped, tag = 'scoped memory for mlp_pallas.1']
    %10 = vsyncpa [#allocation3], 0
    // Predicated region
    $region2: #{mlp_pallas.1} parent=1 // pred_check
      _
    $region3: #{mlp_pallas.1} parent=1 // pred_check_branch
      %12 = sbr.rel (0) target = $region5
    $region4: #{mlp_pallas.1} parent=1 // pred_region
      _
    $region5: #{mlp_pallas.1} parent=1 // pred_fallthru
      _
    // Predicated region
    $region6: #{mlp_pallas.1} parent=1 // pred_check
      _
    $region7: #{mlp_pallas.1} parent=1 // pred_check_branch
      %14 = sbr.rel (0) target = $region9
    $region8: #{mlp_pallas.1} parent=1 // pred_region
      _
    $region9: #{mlp_pallas.1} parent=1 // pred_fallthru
      _
    // Predicated region
    $region10: #{mlp_pallas.1} parent=1 // pred_check
      _
    $region11: #{mlp_pallas.1} parent=1 // pred_check_branch
      %16 = sbr.rel (0) target = $region13
    $region12: #{mlp_pallas.1} parent=1 // pred_region
      _
    $region13: #{mlp_pallas.1} parent=1 // pred_fallthru
      _
    // Predicated region
    $region14: #{mlp_pallas.1} parent=1 // pred_check
      _
    $region15: #{mlp_pallas.1} parent=1 // pred_check_branch
      %18 = sbr.rel (0) target = $region17
    $region16: #{mlp_pallas.1} parent=1 // pred_region
      _
    $region17: #{mlp_pallas.1} parent=1 // pred_fallthru
      _
    // Predicated region
    $region18: #{mlp_pallas.1} parent=1 // pred_check
      _
    $region19: #{mlp_pallas.1} parent=1 // pred_check_branch
      %20 = sbr.rel (0) target = $region21
    $region20: #{mlp_pallas.1} parent=1 // pred_region
      _
    $region21: #{mlp_pallas.1} parent=1 // pred_fallthru
      _
    %v21 = vld [vmem:[%s0] sm:$0xff]
    %v22 = vld [vmem:[%s0 + $0x8] sm:$0xff]
    %v23 = vld [vmem:[%s1] sm:$0xff]
    %v24 = vld [vmem:[%s1 + $0x8] sm:$0xff]
    %v25 = vld [vmem:[%s1 + $0x10] sm:$0xff]
    %v26 = vld [vmem:[%s1 + $0x18] sm:$0xff]
    %v27 = vld [vmem:[%s2] sm:$0x1]
    %v29 = vperm.slane %v27, 0
    %vm31 = vcmask 261120
    %v33 = vsel %vm31, %v21, 0
    %v36 = vsel %vm31, %v22, 0
    %38 = vmatpush.msra.mxu0 0.0
    %39 = vmatpush.msra.mxu0 0.0
    %40 = vmatpush.msra.mxu0 0.0
    %41 = vmatpush.msra.mxu0 0.0
    %42 = vmatpush.msra.mxu0 0.0
    %43 = vmatpush.msra.mxu0 0.0
    %44 = vmatpush.msra.mxu0 0.0
    %45 = vmatpush.msra.mxu0 0.0
    %46 = vmatpush.msra.mxu0 0.0
    %47 = vmatpush.msra.mxu0 0.0
    %48 = vmatpush.msra.mxu0 0.0
    %49 = vmatpush.msra.mxu0 0.0
    %50 = vmatpush.msra.mxu0 %v26
    %51 = vmatpush.msra.mxu0 %v25
    %52 = vmatpush.msra.mxu0 %v24
    %53 = vmatpush.msra.mxu0 %v23
    %54 = vmatmul.f32.gmra.mxu0 %v33
    %v55 = vpop.f32.mrf.mxu0
    %v56 = vadd.f32 %v29, %v55
    %57 = vmatmul.f32.gmra.mxu0 %v36
    %v58 = vpop.f32.mrf.mxu0
    %v59 = vadd.f32 %v29, %v58
    %60 = vdwg.mxu0
    %v61 = vmul.f32 %v56, 0.5
    %v62 = vmul.f32 %v59, 0.5
    %v63 = vmul.f32 %v56, 0.70710677
    %v64 = vmul.f32 %v59, 0.70710677
    %v65 = vmul.f32 %v63, %v63
    %v66 = vmin.f32 16.0, %v65
    %v67 = vmul.f32 %v66, 2.1237322e-06
    %v68 = vadd.f32 %v67, 0.00028619796
    %v69 = vmul.f32 %v66, %v68
    %v70 = vadd.f32 %v69, 0.0036580483
    %v71 = vmul.f32 %v66, %v70
    %v72 = vadd.f32 %v71, 0.05243302
    %v73 = vmul.f32 %v66, %v72
    %v74 = vadd.f32 %v73, 0.18741608
    %v75 = vmul.f32 %v66, %v74
    %v76 = vadd.f32 %v75, 1.1283791
    %v77 = vmul.f32 %v63, %v76
    %v78 = vmul.f32 %v66, 3.8918573e-05
    %v79 = vadd.f32 %v78, 0.001143296
    %v80 = vmul.f32 %v66, %v79
    %v81 = vadd.f32 %v80, 0.014752088
    %v82 = vmul.f32 %v66, %v81
    %v83 = vadd.f32 %v82, 0.112945676
    %v84 = vmul.f32 %v66, %v83
    %v85 = vadd.f32 %v84, 0.4994258
    %v86 = vmul.f32 %v66, %v85
    %v87 = vadd.f32 %v86, 1.0
    %v88 = vrcp.pop %v87
    %v89 = vmul.f32 %v87, %v88
    %v90 = vsub.f32 1.0, %v89
    %v91 = vmul.f32 %v88, %v90
    %v92 = vadd.f32 %v88, %v91
    %vm93 = vweird.f32 %v87
    %vm94 = vweird.f32 %v88
    %vm95 = vmor %vm93, %vm94
    %v96 = vsel %vm95, %v88, %v92
    %v97 = vand.u32 2147483647, %v87
    %vm98 = vcmp.eq.f32.partialorder %v97, 8.507059e+37
    %v99 = vand.u32 %v87, 2147483648
    %v100 = vor.u32 1.1754944e-38, %v99
    %v101 = vsel %vm98, %v100, %v96
    %v102 = vmul.f32 %v77, %v101
    %v103 = vmin.f32 %v102, 1.0
    %v104 = vmax.f32 %v103, -1.0
    %v105 = vmul.f32 %v64, %v64
    %v106 = vmin.f32 16.0, %v105
    %v107 = vmul.f32 %v106, 2.1237322e-06
    %v108 = vadd.f32 %v107, 0.00028619796
    %v109 = vmul.f32 %v106, %v108
    %v110 = vadd.f32 %v109, 0.0036580483
    %v111 = vmul.f32 %v106, %v110
    %v112 = vadd.f32 %v111, 0.05243302
    %v113 = vmul.f32 %v106, %v112
    %v114 = vadd.f32 %v113, 0.18741608
    %v115 = vmul.f32 %v106, %v114
    %v116 = vadd.f32 %v115, 1.1283791
    %v117 = vmul.f32 %v64, %v116
    %v118 = vmul.f32 %v106, 3.8918573e-05
    %v119 = vadd.f32 %v118, 0.001143296
    %v120 = vmul.f32 %v106, %v119
    %v121 = vadd.f32 %v120, 0.014752088
    %v122 = vmul.f32 %v106, %v121
    %v123 = vadd.f32 %v122, 0.112945676
    %v124 = vmul.f32 %v106, %v123
    %v125 = vadd.f32 %v124, 0.4994258
    %v126 = vmul.f32 %v106, %v125
    %v127 = vadd.f32 %v126, 1.0
    %v128 = vrcp.pop %v127
    %v129 = vmul.f32 %v127, %v128
    %v130 = vsub.f32 1.0, %v129
    %v131 = vmul.f32 %v128, %v130
    %v132 = vadd.f32 %v128, %v131
    %vm133 = vweird.f32 %v127
    %vm134 = vweird.f32 %v128
    %vm135 = vmor %vm133, %vm134
    %v136 = vsel %vm135, %v128, %v132
    %v137 = vand.u32 2147483647, %v127
    %vm138 = vcmp.eq.f32.partialorder %v137, 8.507059e+37
    %v139 = vand.u32 %v127, 2147483648
    %v140 = vor.u32 1.1754944e-38, %v139
    %v141 = vsel %vm138, %v140, %v136
    %v142 = vmul.f32 %v117, %v141
    %v143 = vmin.f32 %v142, 1.0
    %v144 = vmax.f32 %v143, -1.0
    %v145 = vadd.f32 %v104, 1.0
    %v146 = vadd.f32 %v144, 1.0
    %v147 = vmul.f32 %v61, %v145
    %v148 = vmul.f32 %v62, %v146
    %v149 = vld [vmem:[%s3] sm:$0xff]
    %v150 = vld [vmem:[%s3 + $0x8] sm:$0xff]
    %v151 = vld [vmem:[%s3 + $0x10] sm:$0xff]
    %v152 = vld [vmem:[%s3 + $0x18] sm:$0xff]
    %v153 = vld [vmem:[%s3 + $0x20] sm:$0xff]
    %v154 = vld [vmem:[%s3 + $0x28] sm:$0xff]
    %v155 = vld [vmem:[%s3 + $0x30] sm:$0xff]
    %v156 = vld [vmem:[%s3 + $0x38] sm:$0xff]
    %v157 = vld [vmem:[%s3 + $0x40] sm:$0xff]
    %v158 = vld [vmem:[%s3 + $0x48] sm:$0xff]
    %v159 = vld [vmem:[%s3 + $0x50] sm:$0xff]
    %v160 = vld [vmem:[%s3 + $0x58] sm:$0xff]
    %v161 = vld [vmem:[%s3 + $0x60] sm:$0xff]
    %v162 = vld [vmem:[%s3 + $0x68] sm:$0xff]
    %v163 = vld [vmem:[%s3 + $0x70] sm:$0xff]
    %v164 = vld [vmem:[%s3 + $0x78] sm:$0xff]
    %v165 = vld [vmem:[%s4] sm:$0x1]
    %v167 = vperm.slane %v165, 0
    %169 = vmatpush.msra.mxu0 %v164
    %170 = vmatpush.msra.mxu0 %v163
    %171 = vmatpush.msra.mxu0 %v162
    %172 = vmatpush.msra.mxu0 %v161
    %173 = vmatpush.msra.mxu0 %v160
    %174 = vmatpush.msra.mxu0 %v159
    %175 = vmatpush.msra.mxu0 %v158
    %176 = vmatpush.msra.mxu0 %v157
    %177 = vmatpush.msra.mxu0 %v156
    %178 = vmatpush.msra.mxu0 %v155
    %179 = vmatpush.msra.mxu0 %v154
    %180 = vmatpush.msra.mxu0 %v153
    %181 = vmatpush.msra.mxu0 %v152
    %182 = vmatpush.msra.mxu0 %v151
    %183 = vmatpush.msra.mxu0 %v150
    %184 = vmatpush.msra.mxu0 %v149
    %185 = vmatmul.f32.gmra.mxu0 %v147
    %v186 = vpop.f32.mrf.mxu0
    %v187 = vadd.f32 %v167, %v186
    %188 = vmatmul.f32.gmra.mxu0 %v148
    %v189 = vpop.f32.mrf.mxu0
    %v190 = vadd.f32 %v167, %v189
    %191 = vdwg.mxu0
    %192 = vst.msk [vmem:[#allocation2] sm:$0xff] %vm31, %v187
    %193 = vst.msk [vmem:[#allocation2 + $0x8] sm:$0xff] %vm31, %v190
    // Predicated region
    $region22: #{mlp_pallas.1} parent=1 // pred_check
      _
    $region23: #{mlp_pallas.1} parent=1 // pred_check_branch
      %195 = sbr.rel (0) target = $region25
    $region24: #{mlp_pallas.1} parent=1 // pred_region
      %197 = vsyncadd [#allocation3], 0
      %s198 = sshll.u32 [#allocation2], 4
      %s199 = int_to_ptr.vmem [resolvable:$true] %s198
      %s200 = sshll.u32 %s5, 4
      %s201 = int_to_ptr.hbm [resolvable:$true] %s200
      %206 = dma.vmem_to_hbm [thread:$0]  %s199, 256, %s201, [#allocation3], 128, 128, 8
    $region25: #{mlp_pallas.1} parent=1 // pred_fallthru
      _
    // Predicated region
    $region26: #{mlp_pallas.1} parent=1 // pred_check
      _
    $region27: #{mlp_pallas.1} parent=1 // pred_check_branch
      %208 = sbr.rel (0) target = $region29
    $region28: #{mlp_pallas.1} parent=1 // pred_region
      %210 = dma.done [#allocation3], 256
    $region29: #{mlp_pallas.1} parent=1 // pred_fallthru
      _
    %211 = vsyncpa [#allocation3], 1

</llo_original>
